<compile_context>
chip_gen: v5e
topology: v5e:2x2
jax: 0.10.0
libtpu: 0.0.40
codegen_flags: <defaults>
</compile_context>

<pallas_src>
import jax
import jax.numpy as jnp
from jax.experimental import pallas as pl
from jax.experimental.pallas import tpu as pltpu


def build_grid_t(resolution):
    """Channels-first coordinate grid: [4, H*W] float32 (gy, gx, 1-gy, 1-gx)."""
    H, W = resolution
    ranges = [jnp.linspace(0.0, 1.0, num=r) for r in (H, W)]
    gy, gx = jnp.meshgrid(*ranges, indexing="ij")            # each [H, W]
    grid = jnp.stack([gy, gx, 1.0 - gy, 1.0 - gx], axis=0)   # [4, H, W]
    return grid.reshape(4, H * W).astype(jnp.float32)


def _vmem_budget():
    """(vmem_limit_bytes, per-step tile budget) derived from physical VMEM."""
    try:
        phys = int(pltpu.get_tpu_info().vmem_capacity_bytes)
    except Exception:
        phys = 64 * 1024 * 1024                    # conservative (v7x-sized)
    if phys >= 128 * 1024 * 1024:                  # v5e / v6e
        return 96 * 1024 * 1024, 80 * 1024 * 1024
    return 48 * 1024 * 1024, 40 * 1024 * 1024      # v7x (64 MiB physical / TC)


def _choose_tiles(B, C, HWp, x_itemsize, budget):
    """Pick (TC, THW): prefer full-HW contiguous slabs tiled over C; split HW only if needed."""
    def footprint(tc, thw):
        xo = 2 * 2 * tc * thw * max(x_itemsize, 4)     # double-buffered in + out tiles
        gt = 2 * 4 * thw * 4                           # coordinate-grid tile
        wb = 2 * (C * 4 * 4 + C * 4)                   # weight + bias (tiny)
        return xo + gt + wb

    # TC must be a divisor of C and (multiple of 8 or the full C) for the (8,128) rule.
    valid_tc = [d for d in range(1, C + 1) if C % d == 0 and (d % 8 == 0 or d == C)]

    fitting = [d for d in valid_tc if footprint(d, HWp) <= budget]
    if fitting:
        tc, thw = max(fitting), HWp
        # Keep >=4 total grid steps (v7x has 2 TCs sharing "parallel" axes) when possible.
        while B * (C // tc) * (HWp // thw) < 4:
            smaller = [d for d in fitting if d < tc]
            if not smaller:
                break
            tc = max(smaller)
        return tc, thw

    # Fallback for very large HW: smallest C tile + lane-dense HW tiles.
    tc = min(valid_tc)
    cands = [t for t in range(128, HWp + 1, 128)
             if HWp % t == 0 and footprint(tc, t) <= budget]
    return tc, (max(cands) if cands else 128)


def _soft_pos_embed_kernel(gt_ref, w_ref, b_ref, x_ref, o_ref):
    # gt_ref: [4, THW]    coordinate-grid tile (f32), fetched once (constant block index)
    # w_ref : [TC, 4]     Linear weight rows for this C tile (f32)
    # b_ref : [TC, 1]     Linear bias rows (f32)
    # x_ref : [TC, THW]   input tile (batch dim squeezed)
    # o_ref : [TC, THW]   output tile
    gt = gt_ref[...]
    w = w_ref[...]
    # 4-term VPU outer product (no MXU for a K=4 contraction), fused with the add.
    emb = (w[:, 0:1] * gt[0:1, :]
           + w[:, 1:2] * gt[1:2, :]
           + w[:, 2:3] * gt[2:3, :]
           + w[:, 3:4] * gt[3:4, :]
           + b_ref[...])                                           # [TC, THW] f32
    o_ref[...] = (x_ref[...].astype(jnp.float32) + emb).astype(o_ref.dtype)


def soft_position_embed(inputs_nchw, weight, bias, resolution):
    """inputs_nchw: [B, C, H, W]; weight: [C, 4] (PyTorch Linear layout); bias: [C]."""
    B, C, H, W = inputs_nchw.shape
    assert (H, W) == tuple(resolution)
    HW = H * W
    HWp = ((HW + 127) // 128) * 128                    # pad to lane-dense (unmasked vst)

    grid_t = build_grid_t(resolution)                  # [4, HW] f32
    if HWp != HW:
        grid_t = jnp.pad(grid_t, ((0, 0), (0, HWp - HW)))

    w = weight.astype(jnp.float32)                     # [C, 4]
    b2 = bias.reshape(C, 1).astype(jnp.float32)        # [C, 1]

    x = inputs_nchw.reshape(B, C, HW)                  # free reshape, NCHW-native
    if HWp != HW:
        x = jnp.pad(x, ((0, 0), (0, 0), (0, HWp - HW)))

    vmem_limit, budget = _vmem_budget()
    TC, THW = _choose_tiles(B, C, HWp, x.dtype.itemsize, budget)
    n_c = C // TC
    n_t = HWp // THW

    out = pl.pallas_call(
        _soft_pos_embed_kernel,
        out_shape=jax.ShapeDtypeStruct((B, C, HWp), inputs_nchw.dtype),
        grid_spec=pltpu.PrefetchScalarGridSpec(
            num_scalar_prefetch=0,
            grid=(n_t, B, n_c),
            in_specs=[
                pl.BlockSpec((4, THW), lambda t, b_, c: (0, t)),           # coord grid
                pl.BlockSpec((TC, 4), lambda t, b_, c: (c, 0)),            # weight rows
                pl.BlockSpec((TC, 1), lambda t, b_, c: (c, 0)),            # bias rows
                pl.BlockSpec((None, TC, THW), lambda t, b_, c: (b_, c, t)),  # x tile
            ],
            out_specs=pl.BlockSpec((None, TC, THW), lambda t, b_, c: (b_, c, t)),
        ),
        compiler_params=pltpu.CompilerParams(
            dimension_semantics=("parallel", "parallel", "parallel"),
            vmem_limit_bytes=vmem_limit,
        ),
    )(grid_t, w, b2, x)

    if HWp != HW:
        out = out[:, :, :HW]
    return out.reshape(B, C, H, W)


if __name__ == "__main__":
    key = jax.random.PRNGKey(0)
    B, C, H, W = 2, 32, 16, 16     # hidden_size = 32, resolution = (16, 16)

    k_x, k_w, k_b = jax.random.split(key, 3)
    x = jax.random.normal(k_x, (B, C, H, W), dtype=jnp.float32)
    # nn.Linear(4, C): weight [C, 4], bias [C]; deterministic synthetic init.
    weight = jax.random.normal(k_w, (C, 4), dtype=jnp.float32) * 0.5
    bias = jax.random.normal(k_b, (C,), dtype=jnp.float32) * 0.1

    out = soft_position_embed(x, weight, bias, (H, W))
    out = jax.block_until_ready(out)

    # Pure-JAX reference (matches the PyTorch module).
    grid_chw = build_grid_t((H, W)).reshape(4, H, W)                 # [4, H, W]
    emb_ref = jnp.einsum("ck,khw->chw", weight, grid_chw) + bias[:, None, None]
    ref = x + emb_ref[None]                                          # [B, C, H, W]

    assert out.shape == (B, C, H, W)
    assert jnp.allclose(out, ref, atol=1e-5, rtol=1e-5)

    print("KERNEL_OK")
</pallas_src>

<mosaic_0001>
module attributes {stable_mosaic.version = 11 : i64} {
  func.func @_soft_pos_embed_kernel(%arg0: i32, %arg1: i32, %arg2: i32, %arg3: memref<4x256xf32, #tpu.memory_space<vmem>>, %arg4: memref<16x4xf32, #tpu.memory_space<vmem>>, %arg5: memref<16x1xf32, #tpu.memory_space<vmem>>, %arg6: memref<1x16x256xf32, #tpu.memory_space<vmem>>, %arg7: memref<1x16x256xf32, #tpu.memory_space<vmem>>) attributes {dimension_semantics = [#tpu.dimension_semantics<parallel>, #tpu.dimension_semantics<parallel>, #tpu.dimension_semantics<parallel>], iteration_bounds = array<i64: 1, 2, 2>, scalar_prefetch = 0 : i64, scratch_operands = 0 : i64, tpu.core_type = #tpu.core_type<tc>, window_params = [{transform_indices = @transform_0, window_bounds = array<i64: 4, 256>}, {transform_indices = @transform_1, window_bounds = array<i64: 16, 4>}, {transform_indices = @transform_2, window_bounds = array<i64: 16, 1>}, {transform_indices = @transform_3, window_bounds = array<i64: 1, 16, 256>}, {transform_indices = @transform_4, window_bounds = array<i64: 1, 16, 256>}]} {
    %c0 = arith.constant 0 : index
    %c0_0 = arith.constant 0 : index
    %0 = vector.load %arg3[%c0, %c0_0] : memref<4x256xf32, #tpu.memory_space<vmem>>, vector<4x256xf32>
    %c0_1 = arith.constant 0 : index
    %c0_2 = arith.constant 0 : index
    %1 = vector.load %arg4[%c0_1, %c0_2] : memref<16x4xf32, #tpu.memory_space<vmem>>, vector<16x4xf32>
    %2 = vector.extract_strided_slice %1 {offsets = [0, 0], sizes = [16, 1], strides = [1, 1]} : vector<16x4xf32> to vector<16x1xf32>
    %3 = vector.extract_strided_slice %0 {offsets = [0, 0], sizes = [1, 256], strides = [1, 1]} : vector<4x256xf32> to vector<1x256xf32>
    %4 = vector.broadcast %2 : vector<16x1xf32> to vector<16x256xf32>
    %5 = vector.broadcast %3 : vector<1x256xf32> to vector<16x256xf32>
    %6 = arith.mulf %4, %5 : vector<16x256xf32>
    %7 = vector.extract_strided_slice %1 {offsets = [0, 1], sizes = [16, 1], strides = [1, 1]} : vector<16x4xf32> to vector<16x1xf32>
    %8 = vector.extract_strided_slice %0 {offsets = [1, 0], sizes = [1, 256], strides = [1, 1]} : vector<4x256xf32> to vector<1x256xf32>
    %9 = vector.broadcast %7 : vector<16x1xf32> to vector<16x256xf32>
    %10 = vector.broadcast %8 : vector<1x256xf32> to vector<16x256xf32>
    %11 = arith.mulf %9, %10 : vector<16x256xf32>
    %12 = arith.addf %6, %11 : vector<16x256xf32>
    %13 = vector.extract_strided_slice %1 {offsets = [0, 2], sizes = [16, 1], strides = [1, 1]} : vector<16x4xf32> to vector<16x1xf32>
    %14 = vector.extract_strided_slice %0 {offsets = [2, 0], sizes = [1, 256], strides = [1, 1]} : vector<4x256xf32> to vector<1x256xf32>
    %15 = vector.broadcast %13 : vector<16x1xf32> to vector<16x256xf32>
    %16 = vector.broadcast %14 : vector<1x256xf32> to vector<16x256xf32>
    %17 = arith.mulf %15, %16 : vector<16x256xf32>
    %18 = arith.addf %12, %17 : vector<16x256xf32>
    %19 = vector.extract_strided_slice %1 {offsets = [0, 3], sizes = [16, 1], strides = [1, 1]} : vector<16x4xf32> to vector<16x1xf32>
    %20 = vector.extract_strided_slice %0 {offsets = [3, 0], sizes = [1, 256], strides = [1, 1]} : vector<4x256xf32> to vector<1x256xf32>
    %21 = vector.broadcast %19 : vector<16x1xf32> to vector<16x256xf32>
    %22 = vector.broadcast %20 : vector<1x256xf32> to vector<16x256xf32>
    %23 = arith.mulf %21, %22 : vector<16x256xf32>
    %24 = arith.addf %18, %23 : vector<16x256xf32>
    %c0_3 = arith.constant 0 : index
    %c0_4 = arith.constant 0 : index
    %25 = vector.load %arg5[%c0_3, %c0_4] : memref<16x1xf32, #tpu.memory_space<vmem>>, vector<16x1xf32>
    %26 = vector.broadcast %25 : vector<16x1xf32> to vector<16x256xf32>
    %27 = arith.addf %24, %26 : vector<16x256xf32>
    %c0_5 = arith.constant 0 : index
    %c0_6 = arith.constant 0 : index
    %c0_7 = arith.constant 0 : index
    %28 = vector.load %arg6[%c0_5, %c0_6, %c0_7] : memref<1x16x256xf32, #tpu.memory_space<vmem>>, vector<1x16x256xf32>
    %29 = vector.shape_cast %28 : vector<1x16x256xf32> to vector<16x256xf32>
    %30 = arith.addf %29, %27 : vector<16x256xf32>
    %c0_8 = arith.constant 0 : index
    %c0_9 = arith.constant 0 : index
    %c0_10 = arith.constant 0 : index
    %31 = vector.load %arg7[%c0_8, %c0_9, %c0_10] : memref<1x16x256xf32, #tpu.memory_space<vmem>>, vector<1x16x256xf32>
    %32 = vector.shape_cast %31 : vector<1x16x256xf32> to vector<16x256xf32>
    %33 = vector.shape_cast %30 : vector<16x256xf32> to vector<1x16x256xf32>
    tpu.vector_store %arg7[%c0_8, %c0_9, %c0_10], %33 {strides = array<i32>} : memref<1x16x256xf32, #tpu.memory_space<vmem>>, vector<1x16x256xf32>,
    return
  }
  func.func @transform_0(%arg0: i32, %arg1: i32, %arg2: i32) -> (i32, i32) {
    %c0_i32 = arith.constant 0 : i32
    %c0_i32_0 = arith.constant 0 : i32
    return %c0_i32, %arg0 : i32, i32
  }
  func.func @transform_1(%arg0: i32, %arg1: i32, %arg2: i32) -> (i32, i32) {
    %c0_i32 = arith.constant 0 : i32
    %c0_i32_0 = arith.constant 0 : i32
    return %arg2, %c0_i32 : i32, i32
  }
  func.func @transform_2(%arg0: i32, %arg1: i32, %arg2: i32) -> (i32, i32) {
    %c0_i32 = arith.constant 0 : i32
    %c0_i32_0 = arith.constant 0 : i32
    return %arg2, %c0_i32 : i32, i32
  }
  func.func @transform_3(%arg0: i32, %arg1: i32, %arg2: i32) -> (i32, i32, i32) {
    %c0_i32 = arith.constant 0 : i32
    return %arg1, %arg2, %arg0 : i32, i32, i32
  }
  func.func @transform_4(%arg0: i32, %arg1: i32, %arg2: i32) -> (i32, i32, i32) {
    %c0_i32 = arith.constant 0 : i32
    return %arg1, %arg2, %arg0 : i32, i32, i32
  }
}

</mosaic_0001>

<llo_original>
// kernel: tpu_custom_call.1
$region0: #{tpu_custom_call.1}
  #allocation0 [shape = 'u32[]', space=smem, size = 0x4, offset = 0x4, fixed_abs, tag = 'smem constant byte address 0x4 - core index']
  #allocation1 [shape = 'u32[72,128]{1,0:T(1,128)}', space=vmem, size = 0x9000, scoped, tag = 'internal scratch']
  %s0 = inlined_call_operand.vmem [shape: f32[4,256], index: 0, kind: input, shape index: {}]
  %s1 = inlined_call_operand.vmem [shape: f32[32,4], index: 1, kind: input, shape index: {}]
  %s2 = inlined_call_operand.vmem [shape: f32[32,1], index: 2, kind: input, shape index: {}]
  %s3 = inlined_call_operand.hbm [shape: f32[2,32,256], index: 3, kind: input, shape index: {}]
  %s4 = inlined_call_operand.hbm [shape: f32[2,32,256], index: 4, kind: output, shape index: {}]
  %s5 = sld [smem:[#allocation0]]
  $region53: #{tpu_custom_call.1} parent=0
    _
  %s7 = ssub.s32 1, %s5
  %s8 = scalar_select 0, %s7, %s5
  $region1: #{tpu_custom_call.1} parent=0
    #allocation2 [shape = 'u8[32768]{0}', space=vmem, size = 0x8000, scoped, tag = 'input window, operand 3']
    #allocation3 [shape = 's32[2]{0}', space=sflag, size = 0x8, scoped, tag = 'scoped memory for tpu_custom_call.1']
    #allocation4 [shape = 's32[2]{0}', space=sflag, size = 0x8, scoped, tag = 'scoped memory for tpu_custom_call.1']
    #allocation5 [shape = 'u8[32768]{0}', space=vmem, size = 0x8000, scoped, tag = 'output window, operand 0']
    %9 = vsyncpa [#allocation3], 0
    %s10 = scalar_lea.sflag [#allocation3], 1
    %11 = vsyncpa %s10, 0
    %12 = vsyncpa [#allocation4], 0
    %s13 = scalar_lea.sflag [#allocation4], 1
    %14 = vsyncpa %s13, 0
    loop: start=0, step=1, limit=6
    $region2: #{tpu_custom_call.1} parent=1 // loop_pre_header
      _
    $region3: #{tpu_custom_call.1} parent=1 // loop_header
      %s16 = sphi 0, %s20
      %p17 = scmp.ge.s32.totalorder %s16, 6
      %s23 = sphi 0, %s42
      %s24 = sphi 0, %s38
      %s25 = sphi 0, %s34
      %s26 = sphi 0, %s23
      %s27 = sphi 0, %s24
      %s28 = sphi 0, %s25
      %s29 = sphi 0, %s26
      %s30 = sphi 0, %s27
      %s31 = sphi 0, %s28
      %s45 = sphi 0, %s47
      %s48 = sphi 0, %s45
      %s49 = sphi 0, %s48
      %s65 = sphi 0, %s49
      %s71 = sphi 0, %s73
      %s74 = sphi 0, %s71
      %s75 = sphi 0, %s74
      %s91 = sphi 0, %s75
      %s97 = sphi 0, %s99
      %s100 = sphi 0, %s97
      %s101 = sphi 0, %s100
      %s117 = sphi 0, %s101
      %s127 = sphi 0, %s129
      %s130 = sphi 0, %s127
      %s131 = sphi 0, %s130
      %s147 = sphi 0, %s131
      %s157 = sphi 0, %s159
      %s160 = sphi 0, %s157
      %s161 = sphi 0, %s160
      %s177 = sphi 0, %s161
    $region4: #{tpu_custom_call.1} parent=1 // loop_header_branch
      %19 = sbr.rel (%p17) target = $region8
    $region5: #{tpu_custom_call.1} parent=1 // loop_body
      %s21 = ssub.s32 %s16, 1
      %s22 = ssub.s32 %s16, 2
      %s32 = sadd.s32 1, %s25
      %p33 = scmp.ge.s32.totalorder %s32, 2
      %s34 = scalar_select %p33, 0, %s32
      %s35 = sadd.s32 1, %s24
      %s36 = scalar_select %p33, %s35, %s24
      %p37 = scmp.ge.s32.totalorder %s36, 2
      %s38 = scalar_select %p37, 0, %s36
      %s39 = sadd.s32 1, %s23
      %s40 = scalar_select %p37, %s39, %s23
      %p41 = scmp.ge.s32.totalorder %s40, 1
      %s42 = scalar_select %p41, 0, %s40
      %s43 = ssub.s32 %s23, %s42
      %p44 = scmp.eq.s32.totalorder %s43, 0
      %s46 = sadd.s32 %s45, 1
      %s47 = scalar_select %p44, %s45, %s46
      %p50 = pneg %p44
      %p51 = scmp.eq.s32.totalorder %s16, 3
      %p52 = por %p50, %p51
      %p53 = scmp.ne.s32.totalorder %s45, %s48
      %p54 = scmp.eq.s32.totalorder %s16, 0
      %p55 = por %p53, %p54
      %p56 = scmp.ne.s32.totalorder %s45, %s48
      %p57 = scmp.eq.s32.totalorder %s21, 3
      %p58 = por %p56, %p57
      %p59 = scmp.ne.s32.totalorder %s48, %s49
      %p60 = scmp.eq.s32.totalorder %s21, 0
      %p61 = por %p59, %p60
      %p62 = scmp.ne.s32.totalorder %s48, %s49
      %p63 = scmp.eq.s32.totalorder %s22, 3
      %p64 = por %p62, %p63
      %p66 = scmp.ne.s32.totalorder %s49, %s65
      %p67 = scmp.eq.s32.totalorder %s22, 0
      %p68 = por %p66, %p67
      %s69 = ssub.s32 %s25, %s34
      %p70 = scmp.eq.s32.totalorder %s69, 0
      %s72 = sadd.s32 %s71, 1
      %s73 = scalar_select %p70, %s71, %s72
      %p76 = pneg %p70
      %p77 = scmp.eq.s32.totalorder %s16, 3
      %p78 = por %p76, %p77
      %p79 = scmp.ne.s32.totalorder %s71, %s74
      %p80 = scmp.eq.s32.totalorder %s16, 0
      %p81 = por %p79, %p80
      %p82 = scmp.ne.s32.totalorder %s71, %s74
      %p83 = scmp.eq.s32.totalorder %s21, 3
      %p84 = por %p82, %p83
      %p85 = scmp.ne.s32.totalorder %s74, %s75
      %p86 = scmp.eq.s32.totalorder %s21, 0
      %p87 = por %p85, %p86
      %p88 = scmp.ne.s32.totalorder %s74, %s75
      %p89 = scmp.eq.s32.totalorder %s22, 3
      %p90 = por %p88, %p89
      %p92 = scmp.ne.s32.totalorder %s75, %s91
      %p93 = scmp.eq.s32.totalorder %s22, 0
      %p94 = por %p92, %p93
      %s95 = ssub.s32 %s25, %s34
      %p96 = scmp.eq.s32.totalorder %s95, 0
      %s98 = sadd.s32 %s97, 1
      %s99 = scalar_select %p96, %s97, %s98
      %p102 = pneg %p96
      %p103 = scmp.eq.s32.totalorder %s16, 3
      %p104 = por %p102, %p103
      %p105 = scmp.ne.s32.totalorder %s97, %s100
      %p106 = scmp.eq.s32.totalorder %s16, 0
      %p107 = por %p105, %p106
      %p108 = scmp.ne.s32.totalorder %s97, %s100
      %p109 = scmp.eq.s32.totalorder %s21, 3
      %p110 = por %p108, %p109
      %p111 = scmp.ne.s32.totalorder %s100, %s101
      %p112 = scmp.eq.s32.totalorder %s21, 0
      %p113 = por %p111, %p112
      %p114 = scmp.ne.s32.totalorder %s100, %s101
      %p115 = scmp.eq.s32.totalorder %s22, 3
      %p116 = por %p114, %p115
      %p118 = scmp.ne.s32.totalorder %s101, %s117
      %p119 = scmp.eq.s32.totalorder %s22, 0
      %p120 = por %p118, %p119
      %s121 = ssub.s32 %s24, %s38
      %s122 = ssub.s32 %s25, %s34
      %s123 = sor.u32 %s121, %s122
      %s124 = ssub.s32 %s23, %s42
      %s125 = sor.u32 %s123, %s124
      %p126 = scmp.eq.s32.totalorder %s125, 0
      %s128 = sadd.s32 %s127, 1
      %s129 = scalar_select %p126, %s127, %s128
      %p132 = pneg %p126
      %p133 = scmp.eq.s32.totalorder %s16, 3
      %p134 = por %p132, %p133
      %p135 = scmp.ne.s32.totalorder %s127, %s130
      %p136 = scmp.eq.s32.totalorder %s16, 0
      %p137 = por %p135, %p136
      %p138 = scmp.ne.s32.totalorder %s127, %s130
      %p139 = scmp.eq.s32.totalorder %s21, 3
      %p140 = por %p138, %p139
      %p141 = scmp.ne.s32.totalorder %s130, %s131
      %p142 = scmp.eq.s32.totalorder %s21, 0
      %p143 = por %p141, %p142
      %p144 = scmp.ne.s32.totalorder %s130, %s131
      %p145 = scmp.eq.s32.totalorder %s22, 3
      %p146 = por %p144, %p145
      %p148 = scmp.ne.s32.totalorder %s131, %s147
      %p149 = scmp.eq.s32.totalorder %s22, 0
      %p150 = por %p148, %p149
      %s151 = ssub.s32 %s24, %s38
      %s152 = ssub.s32 %s25, %s34
      %s153 = sor.u32 %s151, %s152
      %s154 = ssub.s32 %s23, %s42
      %s155 = sor.u32 %s153, %s154
      %p156 = scmp.eq.s32.totalorder %s155, 0
      %s158 = sadd.s32 %s157, 1
      %s159 = scalar_select %p156, %s157, %s158
      %p162 = pneg %p156
      %p163 = scmp.eq.s32.totalorder %s16, 3
      %p164 = por %p162, %p163
      %p165 = scmp.ne.s32.totalorder %s157, %s160
      %p166 = scmp.eq.s32.totalorder %s16, 0
      %p167 = por %p165, %p166
      %p168 = scmp.ne.s32.totalorder %s157, %s160
      %p169 = scmp.eq.s32.totalorder %s21, 3
      %p170 = por %p168, %p169
      %p171 = scmp.ne.s32.totalorder %s160, %s161
      %p172 = scmp.eq.s32.totalorder %s21, 0
      %p173 = por %p171, %p172
      %p174 = scmp.ne.s32.totalorder %s160, %s161
      %p175 = scmp.eq.s32.totalorder %s22, 3
      %p176 = por %p174, %p175
      %p178 = scmp.ne.s32.totalorder %s161, %s177
      %p179 = scmp.eq.s32.totalorder %s22, 0
      %p180 = por %p178, %p179
      %p181 = scmp.le.s32.totalorder 1, %s16
      %p182 = scmp.lt.s32.totalorder %s16, 5
      %p183 = pnand %p181, %p182
      %p184 = pneg %p183
      // Predicated region
      $region9: #{tpu_custom_call.1} parent=5 // pred_check
        _
      $region10: #{tpu_custom_call.1} parent=5 // pred_check_branch
        %186 = sbr.rel (%p183) target = $region12
      $region11: #{tpu_custom_call.1} parent=5 // pred_region
        %s187 = ssub.s32 %s16, 1
        // Predicated region
        $region13: #{tpu_custom_call.1} parent=11 // pred_check
          %p188 = pneg %p61
        $region14: #{tpu_custom_call.1} parent=11 // pred_check_branch
          %190 = sbr.rel (%p188) target = $region16
        $region15: #{tpu_custom_call.1} parent=11 // pred_region
          %s191 = smul.u32 2, %s26
          %p192 = scmp.lt.s32.totalorder %s191, 1
          %s193 = scalar_select %p192, %s191, 1
          %s194 = smul.addr %s193, 4
          %s195 = scalar_lea.vmem %s0, %s194
          %s196 = smul.u32 2, %s26
        $region16: #{tpu_custom_call.1} parent=11 // pred_fallthru
          _
      $region12: #{tpu_custom_call.1} parent=5 // pred_fallthru
        _
      %p197 = scmp.lt.s32.totalorder %s16, 4
      // Predicated region
      $region17: #{tpu_custom_call.1} parent=5 // pred_check
        %p198 = pneg %p197
      $region18: #{tpu_custom_call.1} parent=5 // pred_check_branch
        %200 = sbr.rel (%p198) target = $region20
      $region19: #{tpu_custom_call.1} parent=5 // pred_region
        // Predicated region
        $region21: #{tpu_custom_call.1} parent=19 // pred_check
          %p201 = pneg %p81
        $region22: #{tpu_custom_call.1} parent=19 // pred_check_branch
          %203 = sbr.rel (%p201) target = $region24
        $region23: #{tpu_custom_call.1} parent=19 // pred_region
          %s204 = smul.u32 2, %s25
          %p205 = scmp.lt.s32.totalorder %s204, 3
          %s206 = scalar_select %p205, %s204, 3
          %s207 = smul.addr %s206, 8
          %s208 = scalar_lea.vmem %s1, %s207
          %s209 = smul.u32 2, %s25
        $region24: #{tpu_custom_call.1} parent=19 // pred_fallthru
          _
        // Predicated region
        $region25: #{tpu_custom_call.1} parent=19 // pred_check
          %p210 = pneg %p107
        $region26: #{tpu_custom_call.1} parent=19 // pred_check_branch
          %212 = sbr.rel (%p210) target = $region28
        $region27: #{tpu_custom_call.1} parent=19 // pred_region
          %s213 = smul.u32 2, %s25
          %p214 = scmp.lt.s32.totalorder %s213, 3
          %s215 = scalar_select %p214, %s213, 3
          %s216 = smul.addr %s215, 8
          %s217 = scalar_lea.vmem %s2, %s216
          %s218 = smul.u32 2, %s25
        $region28: #{tpu_custom_call.1} parent=19 // pred_fallthru
          _
        // Predicated region
        $region29: #{tpu_custom_call.1} parent=19 // pred_check
          %p219 = pneg %p137
        $region30: #{tpu_custom_call.1} parent=19 // pred_check_branch
          %221 = sbr.rel (%p219) target = $region32
        $region31: #{tpu_custom_call.1} parent=19 // pred_region
          %s222 = sand.u32 %s127, 1
          %s223 = scalar_lea.sflag [#allocation3], %s222
          %s224 = sand.u32 %s127, 1
          %s225 = smul.addr %s224, 32
          %s226 = scalar_lea.vmem [#allocation2], %s225
          %s227 = smul.u32 2, %s25
          %s228 = smul.u32 2, %s23
          %230 = vsyncadd %s223, 0
          %s231 = smul.addr %s227, 2
          %s232 = sadd.s32 %s228, %s231
          %s233 = smul.addr %s24, 8
          %s234 = sadd.s32 %s232, %s233
          %s235 = smul.addr %s234, 8
          %s236 = scalar_lea.hbm %s3, %s235
          %s237 = sshll.u32 %s236, 4
          %s238 = int_to_ptr.hbm [resolvable:$true] %s237
          %s239 = sshll.u32 %s226, 4
          %s240 = int_to_ptr.vmem [resolvable:$true] %s239
          %245 = dma.hbm_to_vmem [thread:$0]  %s238, 512, %s240, %s223, 256, 256, 16
        $region32: #{tpu_custom_call.1} parent=19 // pred_fallthru
          _
      $region20: #{tpu_custom_call.1} parent=5 // pred_fallthru
        _
      %p246 = scmp.le.s32.totalorder 1, %s16
      %p247 = scmp.lt.s32.totalorder %s16, 5
      %p248 = pnand %p246, %p247
      %p249 = pneg %p248
      // Predicated region
      $region33: #{tpu_custom_call.1} parent=5 // pred_check
        _
      $region34: #{tpu_custom_call.1} parent=5 // pred_check_branch
        %251 = sbr.rel (%p248) target = $region36
      $region35: #{tpu_custom_call.1} parent=5 // pred_region
        %s252 = ssub.s32 %s16, 1
        %s253 = sand.u32 %s130, 1
        %s254 = scalar_lea.sflag [#allocation3], %s253
        %s255 = sand.u32 %s130, 1
        %s256 = smul.addr %s255, 32
        %s257 = scalar_lea.vmem [#allocation2], %s256
        // Predicated region
        $region37: #{tpu_custom_call.1} parent=35 // pred_check
          %p258 = pneg %p143
        $region38: #{tpu_custom_call.1} parent=35 // pred_check_branch
          %260 = sbr.rel (%p258) target = $region40
        $region39: #{tpu_custom_call.1} parent=35 // pred_region
          %262 = dma.done %s254, 512
        $region40: #{tpu_custom_call.1} parent=35 // pred_fallthru
          _
        %s263 = smul.u32 2, %s26
        %p264 = scmp.lt.s32.totalorder %s263, 1
        %s265 = scalar_select %p264, %s263, 1
        %s266 = smul.addr %s265, 4
        %s267 = scalar_lea.vmem %s0, %s266
        %p268 = pneg %p61
        %p269 = pneg %p58
        %s270 = smul.u32 2, %s28
        %p271 = scmp.lt.s32.totalorder %s270, 3
        %s272 = scalar_select %p271, %s270, 3
        %s273 = smul.addr %s272, 8
        %s274 = scalar_lea.vmem %s1, %s273
        %p275 = pneg %p87
        %p276 = pneg %p84
        %s277 = smul.u32 2, %s28
        %p278 = scmp.lt.s32.totalorder %s277, 3
        %s279 = scalar_select %p278, %s277, 3
        %s280 = smul.addr %s279, 8
        %s281 = scalar_lea.vmem %s2, %s280
        %p282 = pneg %p113
        %p283 = pneg %p110
        %s284 = sand.u32 %s130, 1
        %s285 = scalar_lea.sflag [#allocation3], %s284
        %s286 = sand.u32 %s130, 1
        %s287 = smul.addr %s286, 32
        %s288 = scalar_lea.vmem [#allocation2], %s287
        %p289 = pneg %p143
        %p290 = pneg %p140
        %p291 = pneg %p173
        %p292 = pneg %p170
        %s293 = sand.u32 %s160, 1
        %s294 = scalar_lea.sflag [#allocation4], %s293
        %s295 = sand.u32 %s160, 1
        %s296 = smul.addr %s295, 32
        %s297 = scalar_lea.vmem [#allocation5], %s296
        %s298 = smul.u32 2, %s26
        %p299 = scmp.lt.s32.totalorder %s298, 1
        %s300 = scalar_select %p299, %s298, 1
        %s301 = smul.addr %s300, 4
        %s302 = scalar_lea.vmem %s0, %s301
        %s303 = smul.u32 2, %s26
        %s304 = smul.u32 2, %s28
        %p305 = scmp.lt.s32.totalorder %s304, 3
        %s306 = scalar_select %p305, %s304, 3
        %s307 = smul.addr %s306, 8
        %s308 = scalar_lea.vmem %s1, %s307
        %s309 = smul.u32 2, %s28
        %s310 = smul.u32 2, %s28
        %p311 = scmp.lt.s32.totalorder %s310, 3
        %s312 = scalar_select %p311, %s310, 3
        %s313 = smul.addr %s312, 8
        %s314 = scalar_lea.vmem %s2, %s313
        %s315 = smul.u32 2, %s28
        %s316 = smul.u32 2, %s28
        %s317 = smul.u32 2, %s26
        %s318 = smul.u32 2, %s28
        %s319 = smul.u32 2, %s26
        %v320 = vld [vmem:[%s302] sm:$0xff]
        %v321 = vld [vmem:[%s308] sm:$0xff]
        %v322 = vld [vmem:[%s308 + $0x8] sm:$0xff]
        %324 = vset.pattern.permute.xlu0 0
        %325 = vperm.xlu0 %324, %v321
        %v326 = vpop.permute.xlu0 %325
        %329 = vset.pattern.permute.xlu0 0
        %330 = vperm.xlu0 %329, %v322
        %v331 = vpop.permute.xlu0 %330
        %v334 = vperm.slane %v320, 0
        %v335 = vperm.slane %v320, 4
        %v338 = vperm.slane %v334, 0
        %v339 = vperm.slane %v335, 0
        %v340 = vmul.f32 %v326, %v338
        %v341 = vmul.f32 %v326, %v339
        %v342 = vmul.f32 %v331, %v338
        %v343 = vmul.f32 %v331, %v339
        %344 = vset.pattern.permute.xlu0 1
        %345 = vperm.xlu0 %344, %v321
        %v346 = vpop.permute.xlu0 %345
        %348 = vset.pattern.permute.xlu0 1
        %349 = vperm.xlu0 %348, %v322
        %v350 = vpop.permute.xlu0 %349
        %v352 = vperm.slane %v320, 1
        %v353 = vperm.slane %v320, 5
        %v356 = vperm.slane %v352, 1
        %v357 = vperm.slane %v353, 1
        %v358 = vmul.f32 %v346, %v356
        %v359 = vmul.f32 %v346, %v357
        %v360 = vmul.f32 %v350, %v356
        %v361 = vmul.f32 %v350, %v357
        %v362 = vadd.f32 %v340, %v358
        %v363 = vadd.f32 %v341, %v359
        %v364 = vadd.f32 %v342, %v360
        %v365 = vadd.f32 %v343, %v361
        %366 = vset.pattern.permute.xlu0 2
        %367 = vperm.xlu0 %366, %v321
        %v368 = vpop.permute.xlu0 %367
        %370 = vset.pattern.permute.xlu0 2
        %371 = vperm.xlu0 %370, %v322
        %v372 = vpop.permute.xlu0 %371
        %v374 = vperm.slane %v320, 2
        %v375 = vperm.slane %v320, 6
        %v378 = vperm.slane %v374, 2
        %v379 = vperm.slane %v375, 2
        %v380 = vmul.f32 %v368, %v378
        %v381 = vmul.f32 %v368, %v379
        %v382 = vmul.f32 %v372, %v378
        %v383 = vmul.f32 %v372, %v379
        %v384 = vadd.f32 %v362, %v380
        %v385 = vadd.f32 %v363, %v381
        %v386 = vadd.f32 %v364, %v382
        %v387 = vadd.f32 %v365, %v383
        %388 = vset.pattern.permute.xlu0 3
        %389 = vperm.xlu0 %388, %v321
        %v390 = vpop.permute.xlu0 %389
        %392 = vset.pattern.permute.xlu0 3
        %393 = vperm.xlu0 %392, %v322
        %v394 = vpop.permute.xlu0 %393
        %v396 = vperm.slane %v320, 3
        %v397 = vperm.slane %v320, 7
        %v400 = vperm.slane %v396, 3
        %v401 = vperm.slane %v397, 3
        %v402 = vmul.f32 %v390, %v400
        %v403 = vmul.f32 %v390, %v401
        %v404 = vmul.f32 %v394, %v400
        %v405 = vmul.f32 %v394, %v401
        %v406 = vadd.f32 %v384, %v402
        %v407 = vadd.f32 %v385, %v403
        %v408 = vadd.f32 %v386, %v404
        %v409 = vadd.f32 %v387, %v405
        %v410 = vld [vmem:[%s314] sm:$0xff]
        %v411 = vld [vmem:[%s314 + $0x8] sm:$0xff]
        %413 = vset.pattern.permute.xlu0 0
        %414 = vperm.xlu0 %413, %v410
        %v415 = vpop.permute.xlu0 %414
        %418 = vset.pattern.permute.xlu0 0
        %419 = vperm.xlu0 %418, %v411
        %v420 = vpop.permute.xlu0 %419
        %v422 = vadd.f32 %v406, %v415
        %v423 = vadd.f32 %v407, %v415
        %v424 = vadd.f32 %v408, %v420
        %v425 = vadd.f32 %v409, %v420
        %v426 = vld [vmem:[%s257] sm:$0xff]
        %v427 = vld [vmem:[%s257 + $0x8] sm:$0xff]
        %v428 = vld [vmem:[%s257 + $0x10] sm:$0xff]
        %v429 = vld [vmem:[%s257 + $0x18] sm:$0xff]
        %v430 = vadd.f32 %v426, %v422
        %v431 = vadd.f32 %v427, %v423
        %v432 = vadd.f32 %v428, %v424
        %v433 = vadd.f32 %v429, %v425
        %434 = vst [vmem:[%s297] sm:$0xff] %v430
        %435 = vst [vmem:[%s297 + $0x8] sm:$0xff] %v431
        %436 = vst [vmem:[%s297 + $0x10] sm:$0xff] %v432
        %437 = vst [vmem:[%s297 + $0x18] sm:$0xff] %v433
        %s438 = sand.u32 %s160, 1
        %s439 = scalar_lea.sflag [#allocation4], %s438
        %s440 = sand.u32 %s160, 1
        %s441 = smul.addr %s440, 32
        %s442 = scalar_lea.vmem [#allocation5], %s441
        // Predicated region
        $region41: #{tpu_custom_call.1} parent=35 // pred_check
          %p443 = pneg %p170
        $region42: #{tpu_custom_call.1} parent=35 // pred_check_branch
          %445 = sbr.rel (%p443) target = $region44
        $region43: #{tpu_custom_call.1} parent=35 // pred_region
          %s446 = smul.u32 2, %s28
          %s447 = smul.u32 2, %s26
          %449 = vsyncadd %s439, 0
          %s450 = smul.addr %s446, 2
          %s451 = sadd.s32 %s447, %s450
          %s452 = smul.addr %s27, 8
          %s453 = sadd.s32 %s451, %s452
          %s454 = smul.addr %s453, 8
          %s455 = scalar_lea.hbm %s4, %s454
          %s456 = sshll.u32 %s442, 4
          %s457 = int_to_ptr.vmem [resolvable:$true] %s456
          %s458 = sshll.u32 %s455, 4
          %s459 = int_to_ptr.hbm [resolvable:$true] %s458
          %464 = dma.vmem_to_hbm [thread:$0]  %s457, 512, %s459, %s439, 256, 256, 16
        $region44: #{tpu_custom_call.1} parent=35 // pred_fallthru
          _
      $region36: #{tpu_custom_call.1} parent=5 // pred_fallthru
        _
      %p465 = scmp.le.s32.totalorder 2, %s16
      // Predicated region
      $region45: #{tpu_custom_call.1} parent=5 // pred_check
        %p466 = pneg %p465
      $region46: #{tpu_custom_call.1} parent=5 // pred_check_branch
        %468 = sbr.rel (%p466) target = $region48
      $region47: #{tpu_custom_call.1} parent=5 // pred_region
        %s469 = ssub.s32 %s16, 2
        // Predicated region
        $region49: #{tpu_custom_call.1} parent=47 // pred_check
          %p470 = pneg %p176
        $region50: #{tpu_custom_call.1} parent=47 // pred_check_branch
          %472 = sbr.rel (%p470) target = $region52
        $region51: #{tpu_custom_call.1} parent=47 // pred_region
          %s473 = sand.u32 %s161, 1
          %s474 = scalar_lea.sflag [#allocation4], %s473
          %s475 = sand.u32 %s161, 1
          %s476 = smul.addr %s475, 32
          %s477 = scalar_lea.vmem [#allocation5], %s476
          %479 = dma.done %s474, 512
        $region52: #{tpu_custom_call.1} parent=47 // pred_fallthru
          _
      $region48: #{tpu_custom_call.1} parent=5 // pred_fallthru
        _
    $region6: #{tpu_custom_call.1} parent=1 // loop_footer
      %s20 = sadd.s32 1, %s16
    $region7: #{tpu_custom_call.1} parent=1 // loop_footer_branch
      %15 = sbr.rel target = $region3
    $region8: #{tpu_custom_call.1} parent=1 // loop_exit
      _
    %480 = vsyncpa [#allocation3], 1
    %s481 = scalar_lea.sflag [#allocation3], 1
    %482 = vsyncpa %s481, 1
    %483 = vsyncpa [#allocation4], 1
    %s484 = scalar_lea.sflag [#allocation4], 1
    %485 = vsyncpa %s484, 1

</llo_original>
